<compile_context>
chip_gen: v7x
topology: tpu7x:2x2x1
jax: 0.10.0
libtpu: 0.0.40
codegen_flags: <defaults>
</compile_context>

<pallas_src>
import jax
import jax.numpy as jnp
from jax.experimental import pallas as pl
from jax.experimental.pallas import tpu as pltpu


def cudavoir_run(w, v, fb_w, b, o, ol_w, num_steps, *, chunk=None, unroll=8):
    """Run `num_steps` fused reservoir updates in one pallas_call.

    Returns (ys, o_final): ys[t] is the y produced by the t-th forward() call
    (ys[-1] is the final v state); o_final is the (1, 1) output state.
    `num_steps` must be a static Python int.
    """
    n = w.shape[0]
    assert num_steps >= 1, "num_steps must be >= 1"

    # ---- wrapper-side layout plumbing (once per call, not per step) --------
    wT     = jnp.asarray(w,    jnp.float32).T            # (n, n): z_row = v_row @ w^T
    v_row  = jnp.asarray(v,    jnp.float32).reshape(1, n)
    fb_row = jnp.asarray(fb_w, jnp.float32).reshape(1, n)
    b_row  = jnp.asarray(b,    jnp.float32).reshape(1, n)
    ol_row = jnp.asarray(ol_w, jnp.float32).reshape(1, n)
    o_11   = jnp.asarray(o,    jnp.float32).reshape(1, 1)

    # ---- time-axis chunking onto a 1-D sequential ("arbitrary") grid -------
    if chunk is None:
        chunk = num_steps if num_steps <= 512 else 512
    chunk = min(chunk, num_steps)
    num_chunks = pl.cdiv(num_steps, chunk)
    if num_chunks > 1 and chunk % 8 != 0:
        chunk = ((chunk + 7) // 8) * 8        # keep (8,128)-aligned ys blocks
        num_chunks = pl.cdiv(num_steps, chunk)
    t_pad = num_chunks * chunk
    unroll = max(1, min(unroll, chunk))

    def kernel(wT_ref, v0_ref, fbw_ref, b_ref, o0_ref, olw_ref,
               ys_ref, ofin_ref, v_sc, o_sc):
        c = pl.program_id(0)

        # First chunk: seed the cross-chunk state scratch from the inputs.
        @pl.when(c == 0)
        def _():
            v_sc[...] = v0_ref[...]
            o_sc[...] = o0_ref[...]
            ofin_ref[...] = o0_ref[...]

        # Hoist loop-invariant reads once per chunk (kept in vregs).
        wT_v  = wT_ref[...]        # (n, n) f32
        fbw   = fbw_ref[...]       # (1, n)
        bb    = b_ref[...]         # (1, n)
        olw   = olw_ref[...]       # (1, n)

        t0 = c * chunk             # global step index of this chunk's step 0

        def step(t, carry):
            y_prev, o_prev = carry                                   # vreg state
            # z = v @ w^T + fb * o + b   (f32 MXU matvec, f32 accumulate)
            z = jnp.dot(y_prev, wT_v, preferred_element_type=jnp.float32)
            z = z + fbw * o_prev + bb
            y = jnp.tanh(z)                                          # EUP, f32
            ys_ref[pl.ds(t, 1), :] = y                               # off crit. path
            # o_new = <ol, y>: VPU multiply + cross-lane reduce (no MXU trip)
            o_new = jnp.sum(olw * y, axis=-1, keepdims=True)         # (1, 1)

            # Record the true final o (guards against padded tail steps).
            @pl.when(t0 + t == num_steps - 1)
            def _():
                ofin_ref[...] = o_new
            return (y, o_new)

        y_c, o_c = jax.lax.fori_loop(0, chunk, step,
                                     (v_sc[...], o_sc[...]),
                                     unroll=unroll)

        # Persist state for the next chunk (once per chunk, not per step).
        v_sc[...] = y_c
        o_sc[...] = o_c

    const = lambda shape: pl.BlockSpec(shape, lambda i: (0,) * len(shape))

    ys_pad, o_fin = pl.pallas_call(
        kernel,
        out_shape=(
            jax.ShapeDtypeStruct((t_pad, n), jnp.float32),   # y per step
            jax.ShapeDtypeStruct((1, 1), jnp.float32),       # final o
        ),
        grid=(num_chunks,),
        in_specs=[
            const((n, n)),   # w^T, DMA'd once, VMEM-resident across the grid
            const((1, n)),   # v0
            const((1, n)),   # fb weight (row)
            const((1, n)),   # bias (row)
            const((1, 1)),   # o0
            const((1, n)),   # ol weight (row)
        ],
        out_specs=(
            pl.BlockSpec((chunk, n), lambda i: (i, 0)),      # ys streams per chunk
            pl.BlockSpec((1, 1), lambda i: (0, 0)),          # final o, resident
        ),
        scratch_shapes=[
            pltpu.VMEM((1, n), jnp.float32),   # v state handoff between chunks
            pltpu.VMEM((1, 1), jnp.float32),   # o state handoff between chunks
        ],
        compiler_params=pltpu.CompilerParams(
            dimension_semantics=("arbitrary",)),
    )(wT, v_row, fb_row, b_row, o_11, ol_row)

    return ys_pad[:num_steps], o_fin


def cudavoir_step(w, v, fb_w, b, o, ol_w):
    """Single forward() step matching the PyTorch module: returns (y, o_new)."""
    ys, o_new = cudavoir_run(w, v, fb_w, b, o, ol_w, num_steps=1)
    return ys[0], o_new[0, 0]


def init_params(key, n, p, sig, o0=0.0, bias=True):
    """Deterministic synthetic parameters matching CUDAvoir.__init__ shapes."""
    k_mask, k_val, k_b, k_ol, k_fb = jax.random.split(key, 5)
    # sparse recurrent weights: w[i,j] ~ N(0, sig) with probability p, else 0
    mask = jax.random.uniform(k_mask, (n, n)) < p
    w = jnp.where(mask, sig * jax.random.normal(k_val, (n, n)), 0.0)
    w = w.astype(jnp.float32)
    # state vector starts at zeros
    v = jnp.zeros((n,), jnp.float32)
    # bias ~ U(0,1) (or zeros)
    b = (jax.random.uniform(k_b, (n,)) if bias
         else jnp.zeros((n,))).astype(jnp.float32)
    # ol: Linear(n, 1, bias=False) -> weight (1, n)
    lim_ol = 1.0 / (n ** 0.5)
    ol_w = jax.random.uniform(k_ol, (1, n), minval=-lim_ol,
                              maxval=lim_ol).astype(jnp.float32)
    # fb: Linear(1, n, bias=False) -> weight (n, 1)
    fb_w = jax.random.uniform(k_fb, (n, 1), minval=-1.0,
                              maxval=1.0).astype(jnp.float32)
    # initial output scalar
    o = jnp.array([o0], jnp.float32)
    return w, v, fb_w, b, o, ol_w


def reference_run(w, v, fb_w, b, o, ol_w, num_steps):
    """Pure-JAX full-f32 reference (matches PyTorch f32 semantics)."""
    n = w.shape[0]
    fb = fb_w.reshape(n)
    bb = b.reshape(n)
    olr = ol_w.reshape(n)
    v_cur = v.reshape(n).astype(jnp.float32)
    o_cur = jnp.asarray(o, jnp.float32).reshape(())
    hi = jax.lax.Precision.HIGHEST
    ys = []
    for _ in range(num_steps):
        z = jnp.dot(w, v_cur, precision=hi) + fb * o_cur + bb
        y = jnp.tanh(z)
        ys.append(y)
        v_cur = y
        o_cur = jnp.dot(olr, y, precision=hi)
    return jnp.stack(ys), o_cur


if __name__ == "__main__":
    n, p, sig, T = 128, 0.1, 0.5, 8
    key = jax.random.PRNGKey(0)
    w, v, fb_w, b, o, ol_w = init_params(key, n, p, sig, o0=0.0, bias=True)

    # Fused multi-step run (single chunk: w resident in VMEM, state in vregs).
    ys, o_fin = cudavoir_run(w, v, fb_w, b, o, ol_w, num_steps=T)
    jax.block_until_ready((ys, o_fin))

    ys_ref, o_ref = reference_run(w, v, fb_w, b, o, ol_w, T)
    assert ys.shape == (T, n)
    assert jnp.allclose(ys, ys_ref, atol=5e-3), "ys mismatch"
    assert jnp.allclose(o_fin[0, 0], o_ref, atol=5e-3), "o mismatch"

    # Multi-chunk (grid) path, with T not a multiple of the chunk size.
    T2 = 19
    ys2, o2 = cudavoir_run(w, v, fb_w, b, o, ol_w, num_steps=T2, chunk=8)
    jax.block_until_ready((ys2, o2))
    ys2_ref, o2_ref = reference_run(w, v, fb_w, b, o, ol_w, T2)
    assert ys2.shape == (T2, n)
    assert jnp.allclose(ys2, ys2_ref, atol=5e-3), "chunked ys mismatch"
    assert jnp.allclose(o2[0, 0], o2_ref, atol=5e-3), "chunked o mismatch"

    # Single-step call == one module forward().
    y1, o1 = cudavoir_step(w, v, fb_w, b, o, ol_w)
    jax.block_until_ready((y1, o1))
    ys1_ref, o1_ref = reference_run(w, v, fb_w, b, o, ol_w, 1)
    assert jnp.allclose(y1, ys1_ref[0], atol=1e-4), "single-step y mismatch"
    assert jnp.allclose(o1, o1_ref, atol=1e-4), "single-step o mismatch"

    print("KERNEL_OK")
</pallas_src>

<mosaic_0001>
module attributes {stable_mosaic.version = 11 : i64} {
  func.func @kernel(%arg0: i32, %arg1: memref<128x128xf32, #tpu.memory_space<vmem>>, %arg2: memref<1x128xf32, #tpu.memory_space<vmem>>, %arg3: memref<1x128xf32, #tpu.memory_space<vmem>>, %arg4: memref<1x128xf32, #tpu.memory_space<vmem>>, %arg5: memref<1x1xf32, #tpu.memory_space<vmem>>, %arg6: memref<1x128xf32, #tpu.memory_space<vmem>>, %arg7: memref<8x128xf32, #tpu.memory_space<vmem>>, %arg8: memref<1x1xf32, #tpu.memory_space<vmem>>, %arg9: memref<1x128xf32, #tpu.memory_space<vmem>>, %arg10: memref<1x1xf32, #tpu.memory_space<vmem>>) attributes {dimension_semantics = [#tpu.dimension_semantics<arbitrary>], iteration_bounds = array<i64: 1>, scalar_prefetch = 0 : i64, scratch_operands = 2 : i64, tpu.core_type = #tpu.core_type<tc>, window_params = [{pipeline_mode = #tpu.pipeline_mode<synchronous>, transform_indices = @transform_0, window_bounds = array<i64: 128, 128>}, {pipeline_mode = #tpu.pipeline_mode<synchronous>, transform_indices = @transform_1, window_bounds = array<i64: 1, 128>}, {pipeline_mode = #tpu.pipeline_mode<synchronous>, transform_indices = @transform_2, window_bounds = array<i64: 1, 128>}, {pipeline_mode = #tpu.pipeline_mode<synchronous>, transform_indices = @transform_3, window_bounds = array<i64: 1, 128>}, {pipeline_mode = #tpu.pipeline_mode<synchronous>, transform_indices = @transform_4, window_bounds = array<i64: 1, 1>}, {pipeline_mode = #tpu.pipeline_mode<synchronous>, transform_indices = @transform_5, window_bounds = array<i64: 1, 128>}, {transform_indices = @transform_6, window_bounds = array<i64: 8, 128>}, {pipeline_mode = #tpu.pipeline_mode<synchronous>, transform_indices = @transform_7, window_bounds = array<i64: 1, 1>}]} {
    %c0_i32 = arith.constant 0 : i32
    %0 = arith.cmpi eq, %arg0, %c0_i32 : i32
    %1 = arith.extui %0 : i1 to i32
    %c0_i32_0 = arith.constant 0 : i32
    %2 = arith.cmpi ne, %1, %c0_i32_0 : i32
    scf.if %2 {
      %c0_57 = arith.constant 0 : index
      %c0_58 = arith.constant 0 : index
      %132 = vector.load %arg2[%c0_57, %c0_58] : memref<1x128xf32, #tpu.memory_space<vmem>>, vector<1x128xf32>
      %c0_59 = arith.constant 0 : index
      %c0_60 = arith.constant 0 : index
      %133 = vector.load %arg9[%c0_59, %c0_60] : memref<1x128xf32, #tpu.memory_space<vmem>>, vector<1x128xf32>
      tpu.vector_store %arg9[%c0_59, %c0_60], %132 {strides = array<i32>} : memref<1x128xf32, #tpu.memory_space<vmem>>, vector<1x128xf32>,
      %c0_61 = arith.constant 0 : index
      %c0_62 = arith.constant 0 : index
      %134 = vector.load %arg5[%c0_61, %c0_62] : memref<1x1xf32, #tpu.memory_space<vmem>>, vector<1x1xf32>
      %c0_63 = arith.constant 0 : index
      %c0_64 = arith.constant 0 : index
      %135 = vector.load %arg10[%c0_63, %c0_64] : memref<1x1xf32, #tpu.memory_space<vmem>>, vector<1x1xf32>
      tpu.vector_store %arg10[%c0_63, %c0_64], %134 {strides = array<i32>} : memref<1x1xf32, #tpu.memory_space<vmem>>, vector<1x1xf32>,
      %c0_65 = arith.constant 0 : index
      %c0_66 = arith.constant 0 : index
      %136 = vector.load %arg5[%c0_65, %c0_66] : memref<1x1xf32, #tpu.memory_space<vmem>>, vector<1x1xf32>
      %c0_67 = arith.constant 0 : index
      %c0_68 = arith.constant 0 : index
      %137 = vector.load %arg8[%c0_67, %c0_68] : memref<1x1xf32, #tpu.memory_space<vmem>>, vector<1x1xf32>
      tpu.vector_store %arg8[%c0_67, %c0_68], %136 {strides = array<i32>} : memref<1x1xf32, #tpu.memory_space<vmem>>, vector<1x1xf32>,
    } else {
    }
    %c0 = arith.constant 0 : index
    %c0_1 = arith.constant 0 : index
    %3 = vector.load %arg1[%c0, %c0_1] : memref<128x128xf32, #tpu.memory_space<vmem>>, vector<128x128xf32>
    %c0_2 = arith.constant 0 : index
    %c0_3 = arith.constant 0 : index
    %4 = vector.load %arg3[%c0_2, %c0_3] : memref<1x128xf32, #tpu.memory_space<vmem>>, vector<1x128xf32>
    %c0_4 = arith.constant 0 : index
    %c0_5 = arith.constant 0 : index
    %5 = vector.load %arg4[%c0_4, %c0_5] : memref<1x128xf32, #tpu.memory_space<vmem>>, vector<1x128xf32>
    %c0_6 = arith.constant 0 : index
    %c0_7 = arith.constant 0 : index
    %6 = vector.load %arg6[%c0_6, %c0_7] : memref<1x128xf32, #tpu.memory_space<vmem>>, vector<1x128xf32>
    %c8_i32 = arith.constant 8 : i32
    %7 = arith.muli %arg0, %c8_i32 : i32
    %c0_8 = arith.constant 0 : index
    %c0_9 = arith.constant 0 : index
    %8 = vector.load %arg9[%c0_8, %c0_9] : memref<1x128xf32, #tpu.memory_space<vmem>>, vector<1x128xf32>
    %c0_10 = arith.constant 0 : index
    %c0_11 = arith.constant 0 : index
    %9 = vector.load %arg10[%c0_10, %c0_11] : memref<1x1xf32, #tpu.memory_space<vmem>>, vector<1x1xf32>
    %c0_i32_12 = arith.constant 0 : i32
    %cst = arith.constant dense<0.000000e+00> : vector<1x128xf32>
    %10 = tpu.matmul %8, %3, %cst {dimension_numbers = #tpu.dot_dimension_numbers<[1], [0], [0], [1], [0, 0, 1, 1], [], []>} : vector<1x128xf32>, vector<128x128xf32>, vector<1x128xf32> -> vector<1x128xf32>
    %11 = vector.broadcast %9 : vector<1x1xf32> to vector<1x128xf32>
    %12 = arith.mulf %4, %11 : vector<1x128xf32>
    %13 = arith.addf %10, %12 : vector<1x128xf32>
    %14 = arith.addf %13, %5 : vector<1x128xf32>
    %15 = math.tanh %14 : vector<1x128xf32>
    %16 = arith.index_cast %c0_i32_12 : i32 to index
    %c0_13 = arith.constant 0 : index
    %17 = vector.load %arg7[%16, %c0_13] : memref<8x128xf32, #tpu.memory_space<vmem>>, vector<1x128xf32>
    tpu.vector_store %arg7[%16, %c0_13], %15 {strides = array<i32>} : memref<8x128xf32, #tpu.memory_space<vmem>>, vector<1x128xf32>,
    %18 = arith.mulf %6, %15 : vector<1x128xf32>
    %cst_14 = arith.constant dense<0.000000e+00> : vector<1xf32>
    %19 = vector.multi_reduction <add>, %18, %cst_14 [1] : vector<1x128xf32> to vector<1xf32>
    %20 = vector.shape_cast %19 : vector<1xf32> to vector<1x1xf32>
    %21 = arith.addi %7, %c0_i32_12 : i32
    %c7_i32 = arith.constant 7 : i32
    %22 = arith.cmpi eq, %21, %c7_i32 : i32
    %23 = arith.extui %22 : i1 to i32
    %c0_i32_15 = arith.constant 0 : i32
    %24 = arith.cmpi ne, %23, %c0_i32_15 : i32
    scf.if %24 {
      %c0_57 = arith.constant 0 : index
      %c0_58 = arith.constant 0 : index
      %132 = vector.load %arg8[%c0_57, %c0_58] : memref<1x1xf32, #tpu.memory_space<vmem>>, vector<1x1xf32>
      tpu.vector_store %arg8[%c0_57, %c0_58], %20 {strides = array<i32>} : memref<1x1xf32, #tpu.memory_space<vmem>>, vector<1x1xf32>,
    } else {
    }
    %c1_i32 = arith.constant 1 : i32
    %cst_16 = arith.constant dense<0.000000e+00> : vector<1x128xf32>
    %25 = tpu.matmul %15, %3, %cst_16 {dimension_numbers = #tpu.dot_dimension_numbers<[1], [0], [0], [1], [0, 0, 1, 1], [], []>} : vector<1x128xf32>, vector<128x128xf32>, vector<1x128xf32> -> vector<1x128xf32>
    %26 = vector.broadcast %20 : vector<1x1xf32> to vector<1x128xf32>
    %27 = arith.mulf %4, %26 : vector<1x128xf32>
    %28 = arith.addf %25, %27 : vector<1x128xf32>
    %29 = arith.addf %28, %5 : vector<1x128xf32>
    %30 = math.tanh %29 : vector<1x128xf32>
    %31 = arith.index_cast %c1_i32 : i32 to index
    %c0_17 = arith.constant 0 : index
    %32 = vector.load %arg7[%31, %c0_17] : memref<8x128xf32, #tpu.memory_space<vmem>>, vector<1x128xf32>
    tpu.vector_store %arg7[%31, %c0_17], %30 {strides = array<i32>} : memref<8x128xf32, #tpu.memory_space<vmem>>, vector<1x128xf32>,
    %33 = arith.mulf %6, %30 : vector<1x128xf32>
    %cst_18 = arith.constant dense<0.000000e+00> : vector<1xf32>
    %34 = vector.multi_reduction <add>, %33, %cst_18 [1] : vector<1x128xf32> to vector<1xf32>
    %35 = vector.shape_cast %34 : vector<1xf32> to vector<1x1xf32>
    %36 = arith.addi %7, %c1_i32 : i32
    %c7_i32_19 = arith.constant 7 : i32
    %37 = arith.cmpi eq, %36, %c7_i32_19 : i32
    %38 = arith.extui %37 : i1 to i32
    %c0_i32_20 = arith.constant 0 : i32
    %39 = arith.cmpi ne, %38, %c0_i32_20 : i32
    scf.if %39 {
      %c0_57 = arith.constant 0 : index
      %c0_58 = arith.constant 0 : index
      %132 = vector.load %arg8[%c0_57, %c0_58] : memref<1x1xf32, #tpu.memory_space<vmem>>, vector<1x1xf32>
      tpu.vector_store %arg8[%c0_57, %c0_58], %35 {strides = array<i32>} : memref<1x1xf32, #tpu.memory_space<vmem>>, vector<1x1xf32>,
    } else {
    }
    %c2_i32 = arith.constant 2 : i32
    %cst_21 = arith.constant dense<0.000000e+00> : vector<1x128xf32>
    %40 = tpu.matmul %30, %3, %cst_21 {dimension_numbers = #tpu.dot_dimension_numbers<[1], [0], [0], [1], [0, 0, 1, 1], [], []>} : vector<1x128xf32>, vector<128x128xf32>, vector<1x128xf32> -> vector<1x128xf32>
    %41 = vector.broadcast %35 : vector<1x1xf32> to vector<1x128xf32>
    %42 = arith.mulf %4, %41 : vector<1x128xf32>
    %43 = arith.addf %40, %42 : vector<1x128xf32>
    %44 = arith.addf %43, %5 : vector<1x128xf32>
    %45 = math.tanh %44 : vector<1x128xf32>
    %46 = arith.index_cast %c2_i32 : i32 to index
    %c0_22 = arith.constant 0 : index
    %47 = vector.load %arg7[%46, %c0_22] : memref<8x128xf32, #tpu.memory_space<vmem>>, vector<1x128xf32>
    tpu.vector_store %arg7[%46, %c0_22], %45 {strides = array<i32>} : memref<8x128xf32, #tpu.memory_space<vmem>>, vector<1x128xf32>,
    %48 = arith.mulf %6, %45 : vector<1x128xf32>
    %cst_23 = arith.constant dense<0.000000e+00> : vector<1xf32>
    %49 = vector.multi_reduction <add>, %48, %cst_23 [1] : vector<1x128xf32> to vector<1xf32>
    %50 = vector.shape_cast %49 : vector<1xf32> to vector<1x1xf32>
    %51 = arith.addi %7, %c2_i32 : i32
    %c7_i32_24 = arith.constant 7 : i32
    %52 = arith.cmpi eq, %51, %c7_i32_24 : i32
    %53 = arith.extui %52 : i1 to i32
    %c0_i32_25 = arith.constant 0 : i32
    %54 = arith.cmpi ne, %53, %c0_i32_25 : i32
    scf.if %54 {
      %c0_57 = arith.constant 0 : index
      %c0_58 = arith.constant 0 : index
      %132 = vector.load %arg8[%c0_57, %c0_58] : memref<1x1xf32, #tpu.memory_space<vmem>>, vector<1x1xf32>
      tpu.vector_store %arg8[%c0_57, %c0_58], %50 {strides = array<i32>} : memref<1x1xf32, #tpu.memory_space<vmem>>, vector<1x1xf32>,
    } else {
    }
    %c3_i32 = arith.constant 3 : i32
    %cst_26 = arith.constant dense<0.000000e+00> : vector<1x128xf32>
    %55 = tpu.matmul %45, %3, %cst_26 {dimension_numbers = #tpu.dot_dimension_numbers<[1], [0], [0], [1], [0, 0, 1, 1], [], []>} : vector<1x128xf32>, vector<128x128xf32>, vector<1x128xf32> -> vector<1x128xf32>
    %56 = vector.broadcast %50 : vector<1x1xf32> to vector<1x128xf32>
    %57 = arith.mulf %4, %56 : vector<1x128xf32>
    %58 = arith.addf %55, %57 : vector<1x128xf32>
    %59 = arith.addf %58, %5 : vector<1x128xf32>
    %60 = math.tanh %59 : vector<1x128xf32>
    %61 = arith.index_cast %c3_i32 : i32 to index
    %c0_27 = arith.constant 0 : index
    %62 = vector.load %arg7[%61, %c0_27] : memref<8x128xf32, #tpu.memory_space<vmem>>, vector<1x128xf32>
    tpu.vector_store %arg7[%61, %c0_27], %60 {strides = array<i32>} : memref<8x128xf32, #tpu.memory_space<vmem>>, vector<1x128xf32>,
    %63 = arith.mulf %6, %60 : vector<1x128xf32>
    %cst_28 = arith.constant dense<0.000000e+00> : vector<1xf32>
    %64 = vector.multi_reduction <add>, %63, %cst_28 [1] : vector<1x128xf32> to vector<1xf32>
    %65 = vector.shape_cast %64 : vector<1xf32> to vector<1x1xf32>
    %66 = arith.addi %7, %c3_i32 : i32
    %c7_i32_29 = arith.constant 7 : i32
    %67 = arith.cmpi eq, %66, %c7_i32_29 : i32
    %68 = arith.extui %67 : i1 to i32
    %c0_i32_30 = arith.constant 0 : i32
    %69 = arith.cmpi ne, %68, %c0_i32_30 : i32
    scf.if %69 {
      %c0_57 = arith.constant 0 : index
      %c0_58 = arith.constant 0 : index
      %132 = vector.load %arg8[%c0_57, %c0_58] : memref<1x1xf32, #tpu.memory_space<vmem>>, vector<1x1xf32>
      tpu.vector_store %arg8[%c0_57, %c0_58], %65 {strides = array<i32>} : memref<1x1xf32, #tpu.memory_space<vmem>>, vector<1x1xf32>,
    } else {
    }
    %c4_i32 = arith.constant 4 : i32
    %cst_31 = arith.constant dense<0.000000e+00> : vector<1x128xf32>
    %70 = tpu.matmul %60, %3, %cst_31 {dimension_numbers = #tpu.dot_dimension_numbers<[1], [0], [0], [1], [0, 0, 1, 1], [], []>} : vector<1x128xf32>, vector<128x128xf32>, vector<1x128xf32> -> vector<1x128xf32>
    %71 = vector.broadcast %65 : vector<1x1xf32> to vector<1x128xf32>
    %72 = arith.mulf %4, %71 : vector<1x128xf32>
    %73 = arith.addf %70, %72 : vector<1x128xf32>
    %74 = arith.addf %73, %5 : vector<1x128xf32>
    %75 = math.tanh %74 : vector<1x128xf32>
    %76 = arith.index_cast %c4_i32 : i32 to index
    %c0_32 = arith.constant 0 : index
    %77 = vector.load %arg7[%76, %c0_32] : memref<8x128xf32, #tpu.memory_space<vmem>>, vector<1x128xf32>
    tpu.vector_store %arg7[%76, %c0_32], %75 {strides = array<i32>} : memref<8x128xf32, #tpu.memory_space<vmem>>, vector<1x128xf32>,
    %78 = arith.mulf %6, %75 : vector<1x128xf32>
    %cst_33 = arith.constant dense<0.000000e+00> : vector<1xf32>
    %79 = vector.multi_reduction <add>, %78, %cst_33 [1] : vector<1x128xf32> to vector<1xf32>
    %80 = vector.shape_cast %79 : vector<1xf32> to vector<1x1xf32>
    %81 = arith.addi %7, %c4_i32 : i32
    %c7_i32_34 = arith.constant 7 : i32
    %82 = arith.cmpi eq, %81, %c7_i32_34 : i32
    %83 = arith.extui %82 : i1 to i32
    %c0_i32_35 = arith.constant 0 : i32
    %84 = arith.cmpi ne, %83, %c0_i32_35 : i32
    scf.if %84 {
      %c0_57 = arith.constant 0 : index
      %c0_58 = arith.constant 0 : index
      %132 = vector.load %arg8[%c0_57, %c0_58] : memref<1x1xf32, #tpu.memory_space<vmem>>, vector<1x1xf32>
      tpu.vector_store %arg8[%c0_57, %c0_58], %80 {strides = array<i32>} : memref<1x1xf32, #tpu.memory_space<vmem>>, vector<1x1xf32>,
    } else {
    }
    %c5_i32 = arith.constant 5 : i32
    %cst_36 = arith.constant dense<0.000000e+00> : vector<1x128xf32>
    %85 = tpu.matmul %75, %3, %cst_36 {dimension_numbers = #tpu.dot_dimension_numbers<[1], [0], [0], [1], [0, 0, 1, 1], [], []>} : vector<1x128xf32>, vector<128x128xf32>, vector<1x128xf32> -> vector<1x128xf32>
    %86 = vector.broadcast %80 : vector<1x1xf32> to vector<1x128xf32>
    %87 = arith.mulf %4, %86 : vector<1x128xf32>
    %88 = arith.addf %85, %87 : vector<1x128xf32>
    %89 = arith.addf %88, %5 : vector<1x128xf32>
    %90 = math.tanh %89 : vector<1x128xf32>
    %91 = arith.index_cast %c5_i32 : i32 to index
    %c0_37 = arith.constant 0 : index
    %92 = vector.load %arg7[%91, %c0_37] : memref<8x128xf32, #tpu.memory_space<vmem>>, vector<1x128xf32>
    tpu.vector_store %arg7[%91, %c0_37], %90 {strides = array<i32>} : memref<8x128xf32, #tpu.memory_space<vmem>>, vector<1x128xf32>,
    %93 = arith.mulf %6, %90 : vector<1x128xf32>
    %cst_38 = arith.constant dense<0.000000e+00> : vector<1xf32>
    %94 = vector.multi_reduction <add>, %93, %cst_38 [1] : vector<1x128xf32> to vector<1xf32>
    %95 = vector.shape_cast %94 : vector<1xf32> to vector<1x1xf32>
    %96 = arith.addi %7, %c5_i32 : i32
    %c7_i32_39 = arith.constant 7 : i32
    %97 = arith.cmpi eq, %96, %c7_i32_39 : i32
    %98 = arith.extui %97 : i1 to i32
    %c0_i32_40 = arith.constant 0 : i32
    %99 = arith.cmpi ne, %98, %c0_i32_40 : i32
    scf.if %99 {
      %c0_57 = arith.constant 0 : index
      %c0_58 = arith.constant 0 : index
      %132 = vector.load %arg8[%c0_57, %c0_58] : memref<1x1xf32, #tpu.memory_space<vmem>>, vector<1x1xf32>
      tpu.vector_store %arg8[%c0_57, %c0_58], %95 {strides = array<i32>} : memref<1x1xf32, #tpu.memory_space<vmem>>, vector<1x1xf32>,
    } else {
    }
    %c6_i32 = arith.constant 6 : i32
    %cst_41 = arith.constant dense<0.000000e+00> : vector<1x128xf32>
    %100 = tpu.matmul %90, %3, %cst_41 {dimension_numbers = #tpu.dot_dimension_numbers<[1], [0], [0], [1], [0, 0, 1, 1], [], []>} : vector<1x128xf32>, vector<128x128xf32>, vector<1x128xf32> -> vector<1x128xf32>
    %101 = vector.broadcast %95 : vector<1x1xf32> to vector<1x128xf32>
    %102 = arith.mulf %4, %101 : vector<1x128xf32>
    %103 = arith.addf %100, %102 : vector<1x128xf32>
    %104 = arith.addf %103, %5 : vector<1x128xf32>
    %105 = math.tanh %104 : vector<1x128xf32>
    %106 = arith.index_cast %c6_i32 : i32 to index
    %c0_42 = arith.constant 0 : index
    %107 = vector.load %arg7[%106, %c0_42] : memref<8x128xf32, #tpu.memory_space<vmem>>, vector<1x128xf32>
    tpu.vector_store %arg7[%106, %c0_42], %105 {strides = array<i32>} : memref<8x128xf32, #tpu.memory_space<vmem>>, vector<1x128xf32>,
    %108 = arith.mulf %6, %105 : vector<1x128xf32>
    %cst_43 = arith.constant dense<0.000000e+00> : vector<1xf32>
    %109 = vector.multi_reduction <add>, %108, %cst_43 [1] : vector<1x128xf32> to vector<1xf32>
    %110 = vector.shape_cast %109 : vector<1xf32> to vector<1x1xf32>
    %111 = arith.addi %7, %c6_i32 : i32
    %c7_i32_44 = arith.constant 7 : i32
    %112 = arith.cmpi eq, %111, %c7_i32_44 : i32
    %113 = arith.extui %112 : i1 to i32
    %c0_i32_45 = arith.constant 0 : i32
    %114 = arith.cmpi ne, %113, %c0_i32_45 : i32
    scf.if %114 {
      %c0_57 = arith.constant 0 : index
      %c0_58 = arith.constant 0 : index
      %132 = vector.load %arg8[%c0_57, %c0_58] : memref<1x1xf32, #tpu.memory_space<vmem>>, vector<1x1xf32>
      tpu.vector_store %arg8[%c0_57, %c0_58], %110 {strides = array<i32>} : memref<1x1xf32, #tpu.memory_space<vmem>>, vector<1x1xf32>,
    } else {
    }
    %c7_i32_46 = arith.constant 7 : i32
    %cst_47 = arith.constant dense<0.000000e+00> : vector<1x128xf32>
    %115 = tpu.matmul %105, %3, %cst_47 {dimension_numbers = #tpu.dot_dimension_numbers<[1], [0], [0], [1], [0, 0, 1, 1], [], []>} : vector<1x128xf32>, vector<128x128xf32>, vector<1x128xf32> -> vector<1x128xf32>
    %116 = vector.broadcast %110 : vector<1x1xf32> to vector<1x128xf32>
    %117 = arith.mulf %4, %116 : vector<1x128xf32>
    %118 = arith.addf %115, %117 : vector<1x128xf32>
    %119 = arith.addf %118, %5 : vector<1x128xf32>
    %120 = math.tanh %119 : vector<1x128xf32>
    %121 = arith.index_cast %c7_i32_46 : i32 to index
    %c0_48 = arith.constant 0 : index
    %122 = vector.load %arg7[%121, %c0_48] : memref<8x128xf32, #tpu.memory_space<vmem>>, vector<1x128xf32>
    tpu.vector_store %arg7[%121, %c0_48], %120 {strides = array<i32>} : memref<8x128xf32, #tpu.memory_space<vmem>>, vector<1x128xf32>,
    %123 = arith.mulf %6, %120 : vector<1x128xf32>
    %cst_49 = arith.constant dense<0.000000e+00> : vector<1xf32>
    %124 = vector.multi_reduction <add>, %123, %cst_49 [1] : vector<1x128xf32> to vector<1xf32>
    %125 = vector.shape_cast %124 : vector<1xf32> to vector<1x1xf32>
    %126 = arith.addi %7, %c7_i32_46 : i32
    %c7_i32_50 = arith.constant 7 : i32
    %127 = arith.cmpi eq, %126, %c7_i32_50 : i32
    %128 = arith.extui %127 : i1 to i32
    %c0_i32_51 = arith.constant 0 : i32
    %129 = arith.cmpi ne, %128, %c0_i32_51 : i32
    scf.if %129 {
      %c0_57 = arith.constant 0 : index
      %c0_58 = arith.constant 0 : index
      %132 = vector.load %arg8[%c0_57, %c0_58] : memref<1x1xf32, #tpu.memory_space<vmem>>, vector<1x1xf32>
      tpu.vector_store %arg8[%c0_57, %c0_58], %125 {strides = array<i32>} : memref<1x1xf32, #tpu.memory_space<vmem>>, vector<1x1xf32>,
    } else {
    }
    %c8_i32_52 = arith.constant 8 : i32
    %c0_53 = arith.constant 0 : index
    %c0_54 = arith.constant 0 : index
    %130 = vector.load %arg9[%c0_53, %c0_54] : memref<1x128xf32, #tpu.memory_space<vmem>>, vector<1x128xf32>
    tpu.vector_store %arg9[%c0_53, %c0_54], %120 {strides = array<i32>} : memref<1x128xf32, #tpu.memory_space<vmem>>, vector<1x128xf32>,
    %c0_55 = arith.constant 0 : index
    %c0_56 = arith.constant 0 : index
    %131 = vector.load %arg10[%c0_55, %c0_56] : memref<1x1xf32, #tpu.memory_space<vmem>>, vector<1x1xf32>
    tpu.vector_store %arg10[%c0_55, %c0_56], %125 {strides = array<i32>} : memref<1x1xf32, #tpu.memory_space<vmem>>, vector<1x1xf32>,
    return
  }
  func.func @transform_0(%arg0: i32) -> (i32, i32) {
    %c0_i32 = arith.constant 0 : i32
    %c0_i32_0 = arith.constant 0 : i32
    %c0_i32_1 = arith.constant 0 : i32
    return %c0_i32, %c0_i32_0 : i32, i32
  }
  func.func @transform_1(%arg0: i32) -> (i32, i32) {
    %c0_i32 = arith.constant 0 : i32
    %c0_i32_0 = arith.constant 0 : i32
    %c0_i32_1 = arith.constant 0 : i32
    return %c0_i32, %c0_i32_0 : i32, i32
  }
  func.func @transform_2(%arg0: i32) -> (i32, i32) {
    %c0_i32 = arith.constant 0 : i32
    %c0_i32_0 = arith.constant 0 : i32
    %c0_i32_1 = arith.constant 0 : i32
    return %c0_i32, %c0_i32_0 : i32, i32
  }
  func.func @transform_3(%arg0: i32) -> (i32, i32) {
    %c0_i32 = arith.constant 0 : i32
    %c0_i32_0 = arith.constant 0 : i32
    %c0_i32_1 = arith.constant 0 : i32
    return %c0_i32, %c0_i32_0 : i32, i32
  }
  func.func @transform_4(%arg0: i32) -> (i32, i32) {
    %c0_i32 = arith.constant 0 : i32
    %c0_i32_0 = arith.constant 0 : i32
    %c0_i32_1 = arith.constant 0 : i32
    return %c0_i32, %c0_i32_0 : i32, i32
  }
  func.func @transform_5(%arg0: i32) -> (i32, i32) {
    %c0_i32 = arith.constant 0 : i32
    %c0_i32_0 = arith.constant 0 : i32
    %c0_i32_1 = arith.constant 0 : i32
    return %c0_i32, %c0_i32_0 : i32, i32
  }
  func.func @transform_6(%arg0: i32) -> (i32, i32) {
    %c0_i32 = arith.constant 0 : i32
    %c0_i32_0 = arith.constant 0 : i32
    return %arg0, %c0_i32 : i32, i32
  }
  func.func @transform_7(%arg0: i32) -> (i32, i32) {
    %c0_i32 = arith.constant 0 : i32
    %c0_i32_0 = arith.constant 0 : i32
    %c0_i32_1 = arith.constant 0 : i32
    return %c0_i32, %c0_i32_0 : i32, i32
  }
}

</mosaic_0001>

<llo_original>
// kernel: tpu_custom_call.1
$region0: #{tpu_custom_call.1}
  #allocation0 [shape = 'u32[]', space=smem, size = 0x4, offset = 0x4, fixed_abs, tag = 'smem constant byte address 0x4 - core index']
  #allocation1 [shape = 'u32[144,128]{1,0:T(1,128)}', space=vmem, size = 0x12000, scoped, tag = 'internal scratch']
  #allocation2 [shape = 'f32[1,128]{1,0:T(1,128)}', space=vmem, size = 0x200, scoped, tag = 'scratch operand']
  #allocation3 [shape = 'f32[1,1]{1,0:T(1,128)}', space=vmem, size = 0x200, scoped, tag = 'scratch operand']
  #allocation4 [shape = 'f32[1,1]{1,0:T(1,128)S(1)}', space=vmem, size = 0x200, scoped, tag = 'scoped memory for tpu_custom_call.1']
  %s0 = inlined_call_operand.hbm [shape: f32[128,128], index: 0, kind: input, shape index: {}]
  %s1 = inlined_call_operand.vmem [shape: f32[1,128], index: 1, kind: input, shape index: {}]
  %s2 = inlined_call_operand.vmem [shape: f32[1,128], index: 2, kind: input, shape index: {}]
  %s3 = inlined_call_operand.vmem [shape: f32[1,128], index: 3, kind: input, shape index: {}]
  %s4 = inlined_call_operand.<no memory space> [shape: f32[1,1], index: 4, kind: input, shape index: {}]
  %s5 = inlined_call_operand.vmem [shape: f32[1,128], index: 5, kind: input, shape index: {}]
  %s6 = inlined_call_operand.hbm [shape: f32[8,128], index: 6, kind: output, shape index: {0}]
  %s7 = inlined_call_operand.hbm [shape: f32[1,1], index: 7, kind: output, shape index: {1}]
  %8 = xla_tuple %s6, %s7
  %s9 = sld [smem:[#allocation0]]
  $region82: #{tpu_custom_call.1} parent=0
    _
  %s11 = ssub.s32 1, %s9
  %s12 = scalar_select 0, %s11, %s9
  %v13 = vstv %s4
  %14 = vst [vmem:[#allocation4] sm:$0x1] %v13
  $region1: #{tpu_custom_call.1} parent=0
    #allocation5 [shape = 'u8[65536]{0}', space=vmem, size = 0x10000, scoped, tag = 'input window, operand 0, single buffered']
    #allocation6 [shape = 's32[1]{0}', space=sflag, size = 0x4, scoped, tag = 'scoped memory for tpu_custom_call.1']
    #allocation7 [shape = 's32[1]{0}', space=sflag, size = 0x4, scoped, tag = 'scoped memory for tpu_custom_call.1']
    #allocation8 [shape = 'u8[4096]{0}', space=vmem, size = 0x1000, scoped, tag = 'output window, operand 0, single buffered']
    #allocation9 [shape = 'u8[512]{0}', space=vmem, size = 0x400, scoped, tag = 'output window, operand 1, single buffered']
    #allocation10 [shape = 's32[1]{0}', space=sflag, size = 0x4, scoped, tag = 'scoped memory for tpu_custom_call.1']
    %15 = vsyncpa [#allocation6], 0
    %16 = vsyncpa [#allocation7], 0
    %17 = vsyncpa [#allocation10], 0
    // Predicated region
    $region2: #{tpu_custom_call.1} parent=1 // pred_check
      _
    $region3: #{tpu_custom_call.1} parent=1 // pred_check_branch
      %19 = sbr.rel (0) target = $region5
    $region4: #{tpu_custom_call.1} parent=1 // pred_region
      %s21 = ssub.s32 2048, 2048
      %22 = vsyncadd [#allocation6], %s21
      %s23 = sshll.u32 [#allocation5], 4
      %s24 = int_to_ptr.vmem [resolvable:$true] %s23
      %29 = dma.hbm_to_vmem [thread:$0]  %s0, 2048, %s24, [#allocation6], 128, 128, 8
    $region5: #{tpu_custom_call.1} parent=1 // pred_fallthru
      _
    // Predicated region
    $region6: #{tpu_custom_call.1} parent=1 // pred_check
      _
    $region7: #{tpu_custom_call.1} parent=1 // pred_check_branch
      %31 = sbr.rel (0) target = $region9
    $region8: #{tpu_custom_call.1} parent=1 // pred_region
      _
    $region9: #{tpu_custom_call.1} parent=1 // pred_fallthru
      _
    // Predicated region
    $region10: #{tpu_custom_call.1} parent=1 // pred_check
      _
    $region11: #{tpu_custom_call.1} parent=1 // pred_check_branch
      %33 = sbr.rel (0) target = $region13
    $region12: #{tpu_custom_call.1} parent=1 // pred_region
      _
    $region13: #{tpu_custom_call.1} parent=1 // pred_fallthru
      _
    // Predicated region
    $region14: #{tpu_custom_call.1} parent=1 // pred_check
      _
    $region15: #{tpu_custom_call.1} parent=1 // pred_check_branch
      %35 = sbr.rel (0) target = $region17
    $region16: #{tpu_custom_call.1} parent=1 // pred_region
      _
    $region17: #{tpu_custom_call.1} parent=1 // pred_fallthru
      _
    // Predicated region
    $region18: #{tpu_custom_call.1} parent=1 // pred_check
      _
    $region19: #{tpu_custom_call.1} parent=1 // pred_check_branch
      %37 = sbr.rel (0) target = $region21
    $region20: #{tpu_custom_call.1} parent=1 // pred_region
      _
    $region21: #{tpu_custom_call.1} parent=1 // pred_fallthru
      _
    // Predicated region
    $region22: #{tpu_custom_call.1} parent=1 // pred_check
      _
    $region23: #{tpu_custom_call.1} parent=1 // pred_check_branch
      %39 = sbr.rel (0) target = $region25
    $region24: #{tpu_custom_call.1} parent=1 // pred_region
      _
    $region25: #{tpu_custom_call.1} parent=1 // pred_fallthru
      _
    // Predicated region
    $region26: #{tpu_custom_call.1} parent=1 // pred_check
      _
    $region27: #{tpu_custom_call.1} parent=1 // pred_check_branch
      %41 = sbr.rel (0) target = $region29
    $region28: #{tpu_custom_call.1} parent=1 // pred_region
      %42 = dma.done [#allocation6], 2048
    $region29: #{tpu_custom_call.1} parent=1 // pred_fallthru
      _
    %p43 = scmp.eq.s32.totalorder 0, 0
    // Predicated region
    $region30: #{tpu_custom_call.1} parent=1 // pred_check
      %p44 = pneg %p43
    $region31: #{tpu_custom_call.1} parent=1 // pred_check_branch
      %46 = sbr.rel (%p44) target = $region33
    $region32: #{tpu_custom_call.1} parent=1 // pred_region
      %v47 = vld [vmem:[%s1] sm:$0x1]
      %48 = vst [vmem:[#allocation2] sm:$0x1] %v47
      %v49 = vld [vmem:[#allocation4] sm:$0x1]
      %vm50 = vcmask 0
      %51 = vst.msk [vmem:[#allocation3] sm:$0x1] %vm50, %v49
      %v52 = vld [vmem:[#allocation4] sm:$0x1]
      %53 = vst.msk [vmem:[#allocation9] sm:$0x1] %vm50, %v52
    $region33: #{tpu_custom_call.1} parent=1 // pred_fallthru
      _
    %v54 = vld [vmem:[#allocation5] sm:$0xff]
    %v55 = vld [vmem:[#allocation5 + $0x8] sm:$0xff]
    %v56 = vld [vmem:[#allocation5 + $0x10] sm:$0xff]
    %v57 = vld [vmem:[#allocation5 + $0x18] sm:$0xff]
    %v58 = vld [vmem:[#allocation5 + $0x20] sm:$0xff]
    %v59 = vld [vmem:[#allocation5 + $0x28] sm:$0xff]
    %v60 = vld [vmem:[#allocation5 + $0x30] sm:$0xff]
    %v61 = vld [vmem:[#allocation5 + $0x38] sm:$0xff]
    %v62 = vld [vmem:[#allocation5 + $0x40] sm:$0xff]
    %v63 = vld [vmem:[#allocation5 + $0x48] sm:$0xff]
    %v64 = vld [vmem:[#allocation5 + $0x50] sm:$0xff]
    %v65 = vld [vmem:[#allocation5 + $0x58] sm:$0xff]
    %v66 = vld [vmem:[#allocation5 + $0x60] sm:$0xff]
    %v67 = vld [vmem:[#allocation5 + $0x68] sm:$0xff]
    %v68 = vld [vmem:[#allocation5 + $0x70] sm:$0xff]
    %v69 = vld [vmem:[#allocation5 + $0x78] sm:$0xff]
    %v70 = vld [vmem:[%s2] sm:$0x1]
    %v71 = vld [vmem:[%s3] sm:$0x1]
    %v72 = vld [vmem:[%s5] sm:$0x1]
    %s73 = smul.u32 0, 8
    %v74 = vld [vmem:[#allocation2] sm:$0x1]
    %v75 = vld [vmem:[#allocation3] sm:$0x1]
    %77 = vset.pattern.permute.xlu0 0
    %78 = vperm.xlu0 %77, %v75
    %v79 = vpop.permute.xlu0 %78
    %v81 = vlaneseq
    %v82 = vshrl.u32 %v81, 7
    %v83 = vsub.s32 0, %v82
    %v84 = vrot.slane %v79, %v83
    %v85 = vmul.f32 %v70, %v84
    %86 = vmatprep.subr.mxu0 0.0
    %87 = vmatpush1.msra.mxu0 %v54
    %88 = vmatprep.subr.mxu0 0.0
    %89 = vmatpush1.msra.mxu0 %v55
    %90 = vmatprep.subr.mxu0 0.0
    %91 = vmatpush1.msra.mxu0 %v56
    %92 = vmatprep.subr.mxu0 0.0
    %93 = vmatpush1.msra.mxu0 %v57
    %94 = vmatprep.subr.mxu0 0.0
    %95 = vmatpush1.msra.mxu0 %v58
    %96 = vmatprep.subr.mxu0 0.0
    %97 = vmatpush1.msra.mxu0 %v59
    %98 = vmatprep.subr.mxu0 0.0
    %99 = vmatpush1.msra.mxu0 %v60
    %100 = vmatprep.subr.mxu0 0.0
    %101 = vmatpush1.msra.mxu0 %v61
    %102 = vmatprep.subr.mxu0 0.0
    %103 = vmatpush1.msra.mxu0 %v62
    %104 = vmatprep.subr.mxu0 0.0
    %105 = vmatpush1.msra.mxu0 %v63
    %106 = vmatprep.subr.mxu0 0.0
    %107 = vmatpush1.msra.mxu0 %v64
    %108 = vmatprep.subr.mxu0 0.0
    %109 = vmatpush1.msra.mxu0 %v65
    %110 = vmatprep.subr.mxu0 0.0
    %111 = vmatpush1.msra.mxu0 %v66
    %112 = vmatprep.subr.mxu0 0.0
    %113 = vmatpush1.msra.mxu0 %v67
    %114 = vmatprep.subr.mxu0 0.0
    %115 = vmatpush1.msra.mxu0 %v68
    %116 = vmatprep.subr.mxu0 0.0
    %117 = vmatpush1.msra.mxu0 %v69
    %118 = vmatprep.subr.mxu0 0.0
    %119 = vmatpush1.msra.mxu0 0.0
    %120 = vmatprep.subr.mxu0 0.0
    %121 = vmatpush1.msra.mxu0 0.0
    %122 = vmatprep.subr.mxu0 0.0
    %123 = vmatpush1.msra.mxu0 0.0
    %124 = vmatprep.subr.mxu0 0.0
    %125 = vmatpush1.msra.mxu0 0.0
    %126 = vmatprep.subr.mxu0 0.0
    %127 = vmatpush1.msra.mxu0 0.0
    %128 = vmatprep.subr.mxu0 0.0
    %129 = vmatpush1.msra.mxu0 0.0
    %130 = vmatprep.subr.mxu0 0.0
    %131 = vmatpush1.msra.mxu0 0.0
    %132 = vmatprep.subr.mxu0 0.0
    %133 = vmatpush1.msra.mxu0 0.0
    %134 = vmatprep.subr.mxu0 0.0
    %135 = vmatpush1.msra.mxu0 0.0
    %136 = vmatprep.subr.mxu0 0.0
    %137 = vmatpush1.msra.mxu0 0.0
    %138 = vmatprep.subr.mxu0 0.0
    %139 = vmatpush1.msra.mxu0 0.0
    %140 = vmatprep.subr.mxu0 0.0
    %141 = vmatpush1.msra.mxu0 0.0
    %142 = vmatprep.subr.mxu0 0.0
    %143 = vmatpush1.msra.mxu0 0.0
    %144 = vmatprep.subr.mxu0 0.0
    %145 = vmatpush1.msra.mxu0 0.0
    %146 = vmatprep.subr.mxu0 0.0
    %147 = vmatpush1.msra.mxu0 0.0
    %148 = vmatprep.subr.mxu0 0.0
    %149 = vmatpush1.msra.mxu0 0.0
    %150 = vmatprep.mubr.f32.mxu0 0.0
    %151 = vmatmul.mubr.f32.gmra.mrb[0].mxu0 %v74
    %v152 = vpop.f32.mrb[0].mxu0
    %v153 = vadd.f32 %v85, %v152
    %v154 = vpop.f32.mrb[0].mxu0
    %155 = vdwg.mxu0
    %v156 = vadd.f32 %v153, %v71
    %v157 = vtanh.pop %v156
    %158 = vst [vmem:[#allocation8] sm:$0x1] %v157
    %v159 = vmul.f32 %v72, %v157
    %vm160 = vcmask 1040384
    %v161 = vsel %vm160, %v159, 0.0
    %162 = vadd.xlane.f32.xlu0 %v161
    %v163 = vpop.xlane.xlu0 %162
    %p164 = scmp.eq.s32.totalorder %s73, 7
    // Predicated region
    $region34: #{tpu_custom_call.1} parent=1 // pred_check
      %p165 = pneg %p164
    $region35: #{tpu_custom_call.1} parent=1 // pred_check_branch
      %167 = sbr.rel (%p165) target = $region37
    $region36: #{tpu_custom_call.1} parent=1 // pred_region
      %vm168 = vcmask 0
      %169 = vst.msk [vmem:[#allocation9] sm:$0x1] %vm168, %v163
    $region37: #{tpu_custom_call.1} parent=1 // pred_fallthru
      _
    %v170 = vmul.f32 %v70, %v163
    %171 = vmatprep.subr.mxu0 0.0
    %172 = vmatpush1.msra.mxu0 %v54
    %173 = vmatprep.subr.mxu0 0.0
    %174 = vmatpush1.msra.mxu0 %v55
    %175 = vmatprep.subr.mxu0 0.0
    %176 = vmatpush1.msra.mxu0 %v56
    %177 = vmatprep.subr.mxu0 0.0
    %178 = vmatpush1.msra.mxu0 %v57
    %179 = vmatprep.subr.mxu0 0.0
    %180 = vmatpush1.msra.mxu0 %v58
    %181 = vmatprep.subr.mxu0 0.0
    %182 = vmatpush1.msra.mxu0 %v59
    %183 = vmatprep.subr.mxu0 0.0
    %184 = vmatpush1.msra.mxu0 %v60
    %185 = vmatprep.subr.mxu0 0.0
    %186 = vmatpush1.msra.mxu0 %v61
    %187 = vmatprep.subr.mxu0 0.0
    %188 = vmatpush1.msra.mxu0 %v62
    %189 = vmatprep.subr.mxu0 0.0
    %190 = vmatpush1.msra.mxu0 %v63
    %191 = vmatprep.subr.mxu0 0.0
    %192 = vmatpush1.msra.mxu0 %v64
    %193 = vmatprep.subr.mxu0 0.0
    %194 = vmatpush1.msra.mxu0 %v65
    %195 = vmatprep.subr.mxu0 0.0
    %196 = vmatpush1.msra.mxu0 %v66
    %197 = vmatprep.subr.mxu0 0.0
    %198 = vmatpush1.msra.mxu0 %v67
    %199 = vmatprep.subr.mxu0 0.0
    %200 = vmatpush1.msra.mxu0 %v68
    %201 = vmatprep.subr.mxu0 0.0
    %202 = vmatpush1.msra.mxu0 %v69
    %203 = vmatprep.subr.mxu0 0.0
    %204 = vmatpush1.msra.mxu0 0.0
    %205 = vmatprep.subr.mxu0 0.0
    %206 = vmatpush1.msra.mxu0 0.0
    %207 = vmatprep.subr.mxu0 0.0
    %208 = vmatpush1.msra.mxu0 0.0
    %209 = vmatprep.subr.mxu0 0.0
    %210 = vmatpush1.msra.mxu0 0.0
    %211 = vmatprep.subr.mxu0 0.0
    %212 = vmatpush1.msra.mxu0 0.0
    %213 = vmatprep.subr.mxu0 0.0
    %214 = vmatpush1.msra.mxu0 0.0
    %215 = vmatprep.subr.mxu0 0.0
    %216 = vmatpush1.msra.mxu0 0.0
    %217 = vmatprep.subr.mxu0 0.0
    %218 = vmatpush1.msra.mxu0 0.0
    %219 = vmatprep.subr.mxu0 0.0
    %220 = vmatpush1.msra.mxu0 0.0
    %221 = vmatprep.subr.mxu0 0.0
    %222 = vmatpush1.msra.mxu0 0.0
    %223 = vmatprep.subr.mxu0 0.0
    %224 = vmatpush1.msra.mxu0 0.0
    %225 = vmatprep.subr.mxu0 0.0
    %226 = vmatpush1.msra.mxu0 0.0
    %227 = vmatprep.subr.mxu0 0.0
    %228 = vmatpush1.msra.mxu0 0.0
    %229 = vmatprep.subr.mxu0 0.0
    %230 = vmatpush1.msra.mxu0 0.0
    %231 = vmatprep.subr.mxu0 0.0
    %232 = vmatpush1.msra.mxu0 0.0
    %233 = vmatprep.subr.mxu0 0.0
    %234 = vmatpush1.msra.mxu0 0.0
    %235 = vmatprep.mubr.f32.mxu0 0.0
    %236 = vmatmul.mubr.f32.gmra.mrb[0].mxu0 %v157
    %v237 = vpop.f32.mrb[0].mxu0
    %v238 = vadd.f32 %v170, %v237
    %v239 = vpop.f32.mrb[0].mxu0
    %240 = vdwg.mxu0
    %v241 = vadd.f32 %v238, %v71
    %v242 = vtanh.pop %v241
    %243 = vst [vmem:[#allocation8 + $0x1] sm:$0x1] %v242
    %v244 = vmul.f32 %v72, %v242
    %v245 = vsel %vm160, %v244, 0.0
    %246 = vadd.xlane.f32.xlu0 %v245
    %v247 = vpop.xlane.xlu0 %246
    %s248 = sadd.s32 %s73, 1
    %p249 = scmp.eq.s32.totalorder %s248, 7
    // Predicated region
    $region38: #{tpu_custom_call.1} parent=1 // pred_check
      %p250 = pneg %p249
    $region39: #{tpu_custom_call.1} parent=1 // pred_check_branch
      %252 = sbr.rel (%p250) target = $region41
    $region40: #{tpu_custom_call.1} parent=1 // pred_region
      %vm253 = vcmask 0
      %254 = vst.msk [vmem:[#allocation9] sm:$0x1] %vm253, %v247
    $region41: #{tpu_custom_call.1} parent=1 // pred_fallthru
      _
    %v255 = vmul.f32 %v70, %v247
    %256 = vmatprep.subr.mxu0 0.0
    %257 = vmatpush1.msra.mxu0 %v54
    %258 = vmatprep.subr.mxu0 0.0
    %259 = vmatpush1.msra.mxu0 %v55
    %260 = vmatprep.subr.mxu0 0.0
    %261 = vmatpush1.msra.mxu0 %v56
    %262 = vmatprep.subr.mxu0 0.0
    %263 = vmatpush1.msra.mxu0 %v57
    %264 = vmatprep.subr.mxu0 0.0
    %265 = vmatpush1.msra.mxu0 %v58
    %266 = vmatprep.subr.mxu0 0.0
    %267 = vmatpush1.msra.mxu0 %v59
    %268 = vmatprep.subr.mxu0 0.0
    %269 = vmatpush1.msra.mxu0 %v60
    %270 = vmatprep.subr.mxu0 0.0
    %271 = vmatpush1.msra.mxu0 %v61
    %272 = vmatprep.subr.mxu0 0.0
    %273 = vmatpush1.msra.mxu0 %v62
    %274 = vmatprep.subr.mxu0 0.0
    %275 = vmatpush1.msra.mxu0 %v63
    %276 = vmatprep.subr.mxu0 0.0
    %277 = vmatpush1.msra.mxu0 %v64
    %278 = vmatprep.subr.mxu0 0.0
    %279 = vmatpush1.msra.mxu0 %v65
    %280 = vmatprep.subr.mxu0 0.0
    %281 = vmatpush1.msra.mxu0 %v66
    %282 = vmatprep.subr.mxu0 0.0
    %283 = vmatpush1.msra.mxu0 %v67
    %284 = vmatprep.subr.mxu0 0.0
    %285 = vmatpush1.msra.mxu0 %v68
    %286 = vmatprep.subr.mxu0 0.0
    %287 = vmatpush1.msra.mxu0 %v69
    %288 = vmatprep.subr.mxu0 0.0
    %289 = vmatpush1.msra.mxu0 0.0
    %290 = vmatprep.subr.mxu0 0.0
    %291 = vmatpush1.msra.mxu0 0.0
    %292 = vmatprep.subr.mxu0 0.0
    %293 = vmatpush1.msra.mxu0 0.0
    %294 = vmatprep.subr.mxu0 0.0
    %295 = vmatpush1.msra.mxu0 0.0
    %296 = vmatprep.subr.mxu0 0.0
    %297 = vmatpush1.msra.mxu0 0.0
    %298 = vmatprep.subr.mxu0 0.0
    %299 = vmatpush1.msra.mxu0 0.0
    %300 = vmatprep.subr.mxu0 0.0
    %301 = vmatpush1.msra.mxu0 0.0
    %302 = vmatprep.subr.mxu0 0.0
    %303 = vmatpush1.msra.mxu0 0.0
    %304 = vmatprep.subr.mxu0 0.0
    %305 = vmatpush1.msra.mxu0 0.0
    %306 = vmatprep.subr.mxu0 0.0
    %307 = vmatpush1.msra.mxu0 0.0
    %308 = vmatprep.subr.mxu0 0.0
    %309 = vmatpush1.msra.mxu0 0.0
    %310 = vmatprep.subr.mxu0 0.0
    %311 = vmatpush1.msra.mxu0 0.0
    %312 = vmatprep.subr.mxu0 0.0
    %313 = vmatpush1.msra.mxu0 0.0
    %314 = vmatprep.subr.mxu0 0.0
    %315 = vmatpush1.msra.mxu0 0.0
    %316 = vmatprep.subr.mxu0 0.0
    %317 = vmatpush1.msra.mxu0 0.0
    %318 = vmatprep.subr.mxu0 0.0
    %319 = vmatpush1.msra.mxu0 0.0
    %320 = vmatprep.mubr.f32.mxu0 0.0
    %321 = vmatmul.mubr.f32.gmra.mrb[0].mxu0 %v242
    %v322 = vpop.f32.mrb[0].mxu0
    %v323 = vadd.f32 %v255, %v322
    %v324 = vpop.f32.mrb[0].mxu0
    %325 = vdwg.mxu0
    %v326 = vadd.f32 %v323, %v71
    %v327 = vtanh.pop %v326
    %328 = vst [vmem:[#allocation8 + $0x2] sm:$0x1] %v327
    %v329 = vmul.f32 %v72, %v327
    %v330 = vsel %vm160, %v329, 0.0
    %331 = vadd.xlane.f32.xlu0 %v330
    %v332 = vpop.xlane.xlu0 %331
    %s333 = sadd.s32 %s73, 2
    %p334 = scmp.eq.s32.totalorder %s333, 7
    // Predicated region
    $region42: #{tpu_custom_call.1} parent=1 // pred_check
      %p335 = pneg %p334
    $region43: #{tpu_custom_call.1} parent=1 // pred_check_branch
      %337 = sbr.rel (%p335) target = $region45
    $region44: #{tpu_custom_call.1} parent=1 // pred_region
      %vm338 = vcmask 0
      %339 = vst.msk [vmem:[#allocation9] sm:$0x1] %vm338, %v332
    $region45: #{tpu_custom_call.1} parent=1 // pred_fallthru
      _
    %v340 = vmul.f32 %v70, %v332
    %341 = vmatprep.subr.mxu0 0.0
    %342 = vmatpush1.msra.mxu0 %v54
    %343 = vmatprep.subr.mxu0 0.0
    %344 = vmatpush1.msra.mxu0 %v55
    %345 = vmatprep.subr.mxu0 0.0
    %346 = vmatpush1.msra.mxu0 %v56
    %347 = vmatprep.subr.mxu0 0.0
    %348 = vmatpush1.msra.mxu0 %v57
    %349 = vmatprep.subr.mxu0 0.0
    %350 = vmatpush1.msra.mxu0 %v58
    %351 = vmatprep.subr.mxu0 0.0
    %352 = vmatpush1.msra.mxu0 %v59
    %353 = vmatprep.subr.mxu0 0.0
    %354 = vmatpush1.msra.mxu0 %v60
    %355 = vmatprep.subr.mxu0 0.0
    %356 = vmatpush1.msra.mxu0 %v61
    %357 = vmatprep.subr.mxu0 0.0
    %358 = vmatpush1.msra.mxu0 %v62
    %359 = vmatprep.subr.mxu0 0.0
    %360 = vmatpush1.msra.mxu0 %v63
    %361 = vmatprep.subr.mxu0 0.0
    %362 = vmatpush1.msra.mxu0 %v64
    %363 = vmatprep.subr.mxu0 0.0
    %364 = vmatpush1.msra.mxu0 %v65
    %365 = vmatprep.subr.mxu0 0.0
    %366 = vmatpush1.msra.mxu0 %v66
    %367 = vmatprep.subr.mxu0 0.0
    %368 = vmatpush1.msra.mxu0 %v67
    %369 = vmatprep.subr.mxu0 0.0
    %370 = vmatpush1.msra.mxu0 %v68
    %371 = vmatprep.subr.mxu0 0.0
    %372 = vmatpush1.msra.mxu0 %v69
    %373 = vmatprep.subr.mxu0 0.0
    %374 = vmatpush1.msra.mxu0 0.0
    %375 = vmatprep.subr.mxu0 0.0
    %376 = vmatpush1.msra.mxu0 0.0
    %377 = vmatprep.subr.mxu0 0.0
    %378 = vmatpush1.msra.mxu0 0.0
    %379 = vmatprep.subr.mxu0 0.0
    %380 = vmatpush1.msra.mxu0 0.0
    %381 = vmatprep.subr.mxu0 0.0
    %382 = vmatpush1.msra.mxu0 0.0
    %383 = vmatprep.subr.mxu0 0.0
    %384 = vmatpush1.msra.mxu0 0.0
    %385 = vmatprep.subr.mxu0 0.0
    %386 = vmatpush1.msra.mxu0 0.0
    %387 = vmatprep.subr.mxu0 0.0
    %388 = vmatpush1.msra.mxu0 0.0
    %389 = vmatprep.subr.mxu0 0.0
    %390 = vmatpush1.msra.mxu0 0.0
    %391 = vmatprep.subr.mxu0 0.0
    %392 = vmatpush1.msra.mxu0 0.0
    %393 = vmatprep.subr.mxu0 0.0
    %394 = vmatpush1.msra.mxu0 0.0
    %395 = vmatprep.subr.mxu0 0.0
    %396 = vmatpush1.msra.mxu0 0.0
    %397 = vmatprep.subr.mxu0 0.0
    %398 = vmatpush1.msra.mxu0 0.0
    %399 = vmatprep.subr.mxu0 0.0
    %400 = vmatpush1.msra.mxu0 0.0
    %401 = vmatprep.subr.mxu0 0.0
    %402 = vmatpush1.msra.mxu0 0.0
    %403 = vmatprep.subr.mxu0 0.0
    %404 = vmatpush1.msra.mxu0 0.0
    %405 = vmatprep.mubr.f32.mxu0 0.0
    %406 = vmatmul.mubr.f32.gmra.mrb[0].mxu0 %v327
    %v407 = vpop.f32.mrb[0].mxu0
    %v408 = vadd.f32 %v340, %v407
    %v409 = vpop.f32.mrb[0].mxu0
    %410 = vdwg.mxu0
    %v411 = vadd.f32 %v408, %v71
    %v412 = vtanh.pop %v411
    %413 = vst [vmem:[#allocation8 + $0x3] sm:$0x1] %v412
    %v414 = vmul.f32 %v72, %v412
    %v415 = vsel %vm160, %v414, 0.0
    %416 = vadd.xlane.f32.xlu0 %v415
    %v417 = vpop.xlane.xlu0 %416
    %s418 = sadd.s32 %s73, 3
    %p419 = scmp.eq.s32.totalorder %s418, 7
    // Predicated region
    $region46: #{tpu_custom_call.1} parent=1 // pred_check
      %p420 = pneg %p419
    $region47: #{tpu_custom_call.1} parent=1 // pred_check_branch
      %422 = sbr.rel (%p420) target = $region49
    $region48: #{tpu_custom_call.1} parent=1 // pred_region
      %vm423 = vcmask 0
      %424 = vst.msk [vmem:[#allocation9] sm:$0x1] %vm423, %v417
    $region49: #{tpu_custom_call.1} parent=1 // pred_fallthru
      _
    %v425 = vmul.f32 %v70, %v417
    %426 = vmatprep.subr.mxu0 0.0
    %427 = vmatpush1.msra.mxu0 %v54
    %428 = vmatprep.subr.mxu0 0.0
    %429 = vmatpush1.msra.mxu0 %v55
    %430 = vmatprep.subr.mxu0 0.0
    %431 = vmatpush1.msra.mxu0 %v56
    %432 = vmatprep.subr.mxu0 0.0
    %433 = vmatpush1.msra.mxu0 %v57
    %434 = vmatprep.subr.mxu0 0.0
    %435 = vmatpush1.msra.mxu0 %v58
    %436 = vmatprep.subr.mxu0 0.0
    %437 = vmatpush1.msra.mxu0 %v59
    %438 = vmatprep.subr.mxu0 0.0
    %439 = vmatpush1.msra.mxu0 %v60
    %440 = vmatprep.subr.mxu0 0.0
    %441 = vmatpush1.msra.mxu0 %v61
    %442 = vmatprep.subr.mxu0 0.0
    %443 = vmatpush1.msra.mxu0 %v62
    %444 = vmatprep.subr.mxu0 0.0
    %445 = vmatpush1.msra.mxu0 %v63
    %446 = vmatprep.subr.mxu0 0.0
    %447 = vmatpush1.msra.mxu0 %v64
    %448 = vmatprep.subr.mxu0 0.0
    %449 = vmatpush1.msra.mxu0 %v65
    %450 = vmatprep.subr.mxu0 0.0
    %451 = vmatpush1.msra.mxu0 %v66
    %452 = vmatprep.subr.mxu0 0.0
    %453 = vmatpush1.msra.mxu0 %v67
    %454 = vmatprep.subr.mxu0 0.0
    %455 = vmatpush1.msra.mxu0 %v68
    %456 = vmatprep.subr.mxu0 0.0
    %457 = vmatpush1.msra.mxu0 %v69
    %458 = vmatprep.subr.mxu0 0.0
    %459 = vmatpush1.msra.mxu0 0.0
    %460 = vmatprep.subr.mxu0 0.0
    %461 = vmatpush1.msra.mxu0 0.0
    %462 = vmatprep.subr.mxu0 0.0
    %463 = vmatpush1.msra.mxu0 0.0
    %464 = vmatprep.subr.mxu0 0.0
    %465 = vmatpush1.msra.mxu0 0.0
    %466 = vmatprep.subr.mxu0 0.0
    %467 = vmatpush1.msra.mxu0 0.0
    %468 = vmatprep.subr.mxu0 0.0
    %469 = vmatpush1.msra.mxu0 0.0
    %470 = vmatprep.subr.mxu0 0.0
    %471 = vmatpush1.msra.mxu0 0.0
    %472 = vmatprep.subr.mxu0 0.0
    %473 = vmatpush1.msra.mxu0 0.0
    %474 = vmatprep.subr.mxu0 0.0
    %475 = vmatpush1.msra.mxu0 0.0
    %476 = vmatprep.subr.mxu0 0.0
    %477 = vmatpush1.msra.mxu0 0.0
    %478 = vmatprep.subr.mxu0 0.0
    %479 = vmatpush1.msra.mxu0 0.0
    %480 = vmatprep.subr.mxu0 0.0
    %481 = vmatpush1.msra.mxu0 0.0
    %482 = vmatprep.subr.mxu0 0.0
    %483 = vmatpush1.msra.mxu0 0.0
    %484 = vmatprep.subr.mxu0 0.0
    %485 = vmatpush1.msra.mxu0 0.0
    %486 = vmatprep.subr.mxu0 0.0
    %487 = vmatpush1.msra.mxu0 0.0
    %488 = vmatprep.subr.mxu0 0.0
    %489 = vmatpush1.msra.mxu0 0.0
    %490 = vmatprep.mubr.f32.mxu0 0.0
    %491 = vmatmul.mubr.f32.gmra.mrb[0].mxu0 %v412
    %v492 = vpop.f32.mrb[0].mxu0
    %v493 = vadd.f32 %v425, %v492
    %v494 = vpop.f32.mrb[0].mxu0
    %495 = vdwg.mxu0
    %v496 = vadd.f32 %v493, %v71
    %v497 = vtanh.pop %v496
    %498 = vst [vmem:[#allocation8 + $0x4] sm:$0x1] %v497
    %v499 = vmul.f32 %v72, %v497
    %v500 = vsel %vm160, %v499, 0.0
    %501 = vadd.xlane.f32.xlu0 %v500
    %v502 = vpop.xlane.xlu0 %501
    %s503 = sadd.s32 %s73, 4
    %p504 = scmp.eq.s32.totalorder %s503, 7
    // Predicated region
    $region50: #{tpu_custom_call.1} parent=1 // pred_check
      %p505 = pneg %p504
    $region51: #{tpu_custom_call.1} parent=1 // pred_check_branch
      %507 = sbr.rel (%p505) target = $region53
    $region52: #{tpu_custom_call.1} parent=1 // pred_region
      %vm508 = vcmask 0
      %509 = vst.msk [vmem:[#allocation9] sm:$0x1] %vm508, %v502
    $region53: #{tpu_custom_call.1} parent=1 // pred_fallthru
      _
    %v510 = vmul.f32 %v70, %v502
    %511 = vmatprep.subr.mxu0 0.0
    %512 = vmatpush1.msra.mxu0 %v54
    %513 = vmatprep.subr.mxu0 0.0
    %514 = vmatpush1.msra.mxu0 %v55
    %515 = vmatprep.subr.mxu0 0.0
    %516 = vmatpush1.msra.mxu0 %v56
    %517 = vmatprep.subr.mxu0 0.0
    %518 = vmatpush1.msra.mxu0 %v57
    %519 = vmatprep.subr.mxu0 0.0
    %520 = vmatpush1.msra.mxu0 %v58
    %521 = vmatprep.subr.mxu0 0.0
    %522 = vmatpush1.msra.mxu0 %v59
    %523 = vmatprep.subr.mxu0 0.0
    %524 = vmatpush1.msra.mxu0 %v60
    %525 = vmatprep.subr.mxu0 0.0
    %526 = vmatpush1.msra.mxu0 %v61
    %527 = vmatprep.subr.mxu0 0.0
    %528 = vmatpush1.msra.mxu0 %v62
    %529 = vmatprep.subr.mxu0 0.0
    %530 = vmatpush1.msra.mxu0 %v63
    %531 = vmatprep.subr.mxu0 0.0
    %532 = vmatpush1.msra.mxu0 %v64
    %533 = vmatprep.subr.mxu0 0.0
    %534 = vmatpush1.msra.mxu0 %v65
    %535 = vmatprep.subr.mxu0 0.0
    %536 = vmatpush1.msra.mxu0 %v66
    %537 = vmatprep.subr.mxu0 0.0
    %538 = vmatpush1.msra.mxu0 %v67
    %539 = vmatprep.subr.mxu0 0.0
    %540 = vmatpush1.msra.mxu0 %v68
    %541 = vmatprep.subr.mxu0 0.0
    %542 = vmatpush1.msra.mxu0 %v69
    %543 = vmatprep.subr.mxu0 0.0
    %544 = vmatpush1.msra.mxu0 0.0
    %545 = vmatprep.subr.mxu0 0.0
    %546 = vmatpush1.msra.mxu0 0.0
    %547 = vmatprep.subr.mxu0 0.0
    %548 = vmatpush1.msra.mxu0 0.0
    %549 = vmatprep.subr.mxu0 0.0
    %550 = vmatpush1.msra.mxu0 0.0
    %551 = vmatprep.subr.mxu0 0.0
    %552 = vmatpush1.msra.mxu0 0.0
    %553 = vmatprep.subr.mxu0 0.0
    %554 = vmatpush1.msra.mxu0 0.0
    %555 = vmatprep.subr.mxu0 0.0
    %556 = vmatpush1.msra.mxu0 0.0
    %557 = vmatprep.subr.mxu0 0.0
    %558 = vmatpush1.msra.mxu0 0.0
    %559 = vmatprep.subr.mxu0 0.0
    %560 = vmatpush1.msra.mxu0 0.0
    %561 = vmatprep.subr.mxu0 0.0
    %562 = vmatpush1.msra.mxu0 0.0
    %563 = vmatprep.subr.mxu0 0.0
    %564 = vmatpush1.msra.mxu0 0.0
    %565 = vmatprep.subr.mxu0 0.0
    %566 = vmatpush1.msra.mxu0 0.0
    %567 = vmatprep.subr.mxu0 0.0
    %568 = vmatpush1.msra.mxu0 0.0
    %569 = vmatprep.subr.mxu0 0.0
    %570 = vmatpush1.msra.mxu0 0.0
    %571 = vmatprep.subr.mxu0 0.0
    %572 = vmatpush1.msra.mxu0 0.0
    %573 = vmatprep.subr.mxu0 0.0
    %574 = vmatpush1.msra.mxu0 0.0
    %575 = vmatprep.mubr.f32.mxu0 0.0
    %576 = vmatmul.mubr.f32.gmra.mrb[0].mxu0 %v497
    %v577 = vpop.f32.mrb[0].mxu0
    %v578 = vadd.f32 %v510, %v577
    %v579 = vpop.f32.mrb[0].mxu0
    %580 = vdwg.mxu0
    %v581 = vadd.f32 %v578, %v71
    %v582 = vtanh.pop %v581
    %583 = vst [vmem:[#allocation8 + $0x5] sm:$0x1] %v582
    %v584 = vmul.f32 %v72, %v582
    %v585 = vsel %vm160, %v584, 0.0
    %586 = vadd.xlane.f32.xlu0 %v585
    %v587 = vpop.xlane.xlu0 %586
    %s588 = sadd.s32 %s73, 5
    %p589 = scmp.eq.s32.totalorder %s588, 7
    // Predicated region
    $region54: #{tpu_custom_call.1} parent=1 // pred_check
      %p590 = pneg %p589
    $region55: #{tpu_custom_call.1} parent=1 // pred_check_branch
      %592 = sbr.rel (%p590) target = $region57
    $region56: #{tpu_custom_call.1} parent=1 // pred_region
      %vm593 = vcmask 0
      %594 = vst.msk [vmem:[#allocation9] sm:$0x1] %vm593, %v587
    $region57: #{tpu_custom_call.1} parent=1 // pred_fallthru
      _
    %v595 = vmul.f32 %v70, %v587
    %596 = vmatprep.subr.mxu0 0.0
    %597 = vmatpush1.msra.mxu0 %v54
    %598 = vmatprep.subr.mxu0 0.0
    %599 = vmatpush1.msra.mxu0 %v55
    %600 = vmatprep.subr.mxu0 0.0
    %601 = vmatpush1.msra.mxu0 %v56
    %602 = vmatprep.subr.mxu0 0.0
    %603 = vmatpush1.msra.mxu0 %v57
    %604 = vmatprep.subr.mxu0 0.0
    %605 = vmatpush1.msra.mxu0 %v58
    %606 = vmatprep.subr.mxu0 0.0
    %607 = vmatpush1.msra.mxu0 %v59
    %608 = vmatprep.subr.mxu0 0.0
    %609 = vmatpush1.msra.mxu0 %v60
    %610 = vmatprep.subr.mxu0 0.0
    %611 = vmatpush1.msra.mxu0 %v61
    %612 = vmatprep.subr.mxu0 0.0
    %613 = vmatpush1.msra.mxu0 %v62
    %614 = vmatprep.subr.mxu0 0.0
    %615 = vmatpush1.msra.mxu0 %v63
    %616 = vmatprep.subr.mxu0 0.0
    %617 = vmatpush1.msra.mxu0 %v64
    %618 = vmatprep.subr.mxu0 0.0
    %619 = vmatpush1.msra.mxu0 %v65
    %620 = vmatprep.subr.mxu0 0.0
    %621 = vmatpush1.msra.mxu0 %v66
    %622 = vmatprep.subr.mxu0 0.0
    %623 = vmatpush1.msra.mxu0 %v67
    %624 = vmatprep.subr.mxu0 0.0
    %625 = vmatpush1.msra.mxu0 %v68
    %626 = vmatprep.subr.mxu0 0.0
    %627 = vmatpush1.msra.mxu0 %v69
    %628 = vmatprep.subr.mxu0 0.0
    %629 = vmatpush1.msra.mxu0 0.0
    %630 = vmatprep.subr.mxu0 0.0
    %631 = vmatpush1.msra.mxu0 0.0
    %632 = vmatprep.subr.mxu0 0.0
    %633 = vmatpush1.msra.mxu0 0.0
    %634 = vmatprep.subr.mxu0 0.0
    %635 = vmatpush1.msra.mxu0 0.0
    %636 = vmatprep.subr.mxu0 0.0
    %637 = vmatpush1.msra.mxu0 0.0
    %638 = vmatprep.subr.mxu0 0.0
    %639 = vmatpush1.msra.mxu0 0.0
    %640 = vmatprep.subr.mxu0 0.0
    %641 = vmatpush1.msra.mxu0 0.0
    %642 = vmatprep.subr.mxu0 0.0
    %643 = vmatpush1.msra.mxu0 0.0
    %644 = vmatprep.subr.mxu0 0.0
    %645 = vmatpush1.msra.mxu0 0.0
    %646 = vmatprep.subr.mxu0 0.0
    %647 = vmatpush1.msra.mxu0 0.0
    %648 = vmatprep.subr.mxu0 0.0
    %649 = vmatpush1.msra.mxu0 0.0
    %650 = vmatprep.subr.mxu0 0.0
    %651 = vmatpush1.msra.mxu0 0.0
    %652 = vmatprep.subr.mxu0 0.0
    %653 = vmatpush1.msra.mxu0 0.0
    %654 = vmatprep.subr.mxu0 0.0
    %655 = vmatpush1.msra.mxu0 0.0
    %656 = vmatprep.subr.mxu0 0.0
    %657 = vmatpush1.msra.mxu0 0.0
    %658 = vmatprep.subr.mxu0 0.0
    %659 = vmatpush1.msra.mxu0 0.0
    %660 = vmatprep.mubr.f32.mxu0 0.0
    %661 = vmatmul.mubr.f32.gmra.mrb[0].mxu0 %v582
    %v662 = vpop.f32.mrb[0].mxu0
    %v663 = vadd.f32 %v595, %v662
    %v664 = vpop.f32.mrb[0].mxu0
    %665 = vdwg.mxu0
    %v666 = vadd.f32 %v663, %v71
    %v667 = vtanh.pop %v666
    %668 = vst [vmem:[#allocation8 + $0x6] sm:$0x1] %v667
    %v669 = vmul.f32 %v72, %v667
    %v670 = vsel %vm160, %v669, 0.0
    %671 = vadd.xlane.f32.xlu0 %v670
    %v672 = vpop.xlane.xlu0 %671
    %s673 = sadd.s32 %s73, 6
    %p674 = scmp.eq.s32.totalorder %s673, 7
    // Predicated region
    $region58: #{tpu_custom_call.1} parent=1 // pred_check
      %p675 = pneg %p674
    $region59: #{tpu_custom_call.1} parent=1 // pred_check_branch
      %677 = sbr.rel (%p675) target = $region61
    $region60: #{tpu_custom_call.1} parent=1 // pred_region
      %vm678 = vcmask 0
      %679 = vst.msk [vmem:[#allocation9] sm:$0x1] %vm678, %v672
    $region61: #{tpu_custom_call.1} parent=1 // pred_fallthru
      _
    %v680 = vmul.f32 %v70, %v672
    %681 = vmatprep.subr.mxu0 0.0
    %682 = vmatpush1.msra.mxu0 %v54
    %683 = vmatprep.subr.mxu0 0.0
    %684 = vmatpush1.msra.mxu0 %v55
    %685 = vmatprep.subr.mxu0 0.0
    %686 = vmatpush1.msra.mxu0 %v56
    %687 = vmatprep.subr.mxu0 0.0
    %688 = vmatpush1.msra.mxu0 %v57
    %689 = vmatprep.subr.mxu0 0.0
    %690 = vmatpush1.msra.mxu0 %v58
    %691 = vmatprep.subr.mxu0 0.0
    %692 = vmatpush1.msra.mxu0 %v59
    %693 = vmatprep.subr.mxu0 0.0
    %694 = vmatpush1.msra.mxu0 %v60
    %695 = vmatprep.subr.mxu0 0.0
    %696 = vmatpush1.msra.mxu0 %v61
    %697 = vmatprep.subr.mxu0 0.0
    %698 = vmatpush1.msra.mxu0 %v62
    %699 = vmatprep.subr.mxu0 0.0
    %700 = vmatpush1.msra.mxu0 %v63
    %701 = vmatprep.subr.mxu0 0.0
    %702 = vmatpush1.msra.mxu0 %v64
    %703 = vmatprep.subr.mxu0 0.0
    %704 = vmatpush1.msra.mxu0 %v65
    %705 = vmatprep.subr.mxu0 0.0
    %706 = vmatpush1.msra.mxu0 %v66
    %707 = vmatprep.subr.mxu0 0.0
    %708 = vmatpush1.msra.mxu0 %v67
    %709 = vmatprep.subr.mxu0 0.0
    %710 = vmatpush1.msra.mxu0 %v68
    %711 = vmatprep.subr.mxu0 0.0
    %712 = vmatpush1.msra.mxu0 %v69
    %713 = vmatprep.subr.mxu0 0.0
    %714 = vmatpush1.msra.mxu0 0.0
    %715 = vmatprep.subr.mxu0 0.0
    %716 = vmatpush1.msra.mxu0 0.0
    %717 = vmatprep.subr.mxu0 0.0
    %718 = vmatpush1.msra.mxu0 0.0
    %719 = vmatprep.subr.mxu0 0.0
    %720 = vmatpush1.msra.mxu0 0.0
    %721 = vmatprep.subr.mxu0 0.0
    %722 = vmatpush1.msra.mxu0 0.0
    %723 = vmatprep.subr.mxu0 0.0
    %724 = vmatpush1.msra.mxu0 0.0
    %725 = vmatprep.subr.mxu0 0.0
    %726 = vmatpush1.msra.mxu0 0.0
    %727 = vmatprep.subr.mxu0 0.0
    %728 = vmatpush1.msra.mxu0 0.0
    %729 = vmatprep.subr.mxu0 0.0
    %730 = vmatpush1.msra.mxu0 0.0
    %731 = vmatprep.subr.mxu0 0.0
    %732 = vmatpush1.msra.mxu0 0.0
    %733 = vmatprep.subr.mxu0 0.0
    %734 = vmatpush1.msra.mxu0 0.0
    %735 = vmatprep.subr.mxu0 0.0
    %736 = vmatpush1.msra.mxu0 0.0
    %737 = vmatprep.subr.mxu0 0.0
    %738 = vmatpush1.msra.mxu0 0.0
    %739 = vmatprep.subr.mxu0 0.0
    %740 = vmatpush1.msra.mxu0 0.0
    %741 = vmatprep.subr.mxu0 0.0
    %742 = vmatpush1.msra.mxu0 0.0
    %743 = vmatprep.subr.mxu0 0.0
    %744 = vmatpush1.msra.mxu0 0.0
    %745 = vmatprep.mubr.f32.mxu0 0.0
    %746 = vmatmul.mubr.f32.gmra.mrb[0].mxu0 %v667
    %v747 = vpop.f32.mrb[0].mxu0
    %v748 = vadd.f32 %v680, %v747
    %v749 = vpop.f32.mrb[0].mxu0
    %750 = vdwg.mxu0
    %v751 = vadd.f32 %v748, %v71
    %v752 = vtanh.pop %v751
    %753 = vst [vmem:[#allocation8 + $0x7] sm:$0x1] %v752
    %v754 = vmul.f32 %v72, %v752
    %v755 = vsel %vm160, %v754, 0.0
    %756 = vadd.xlane.f32.xlu0 %v755
    %v757 = vpop.xlane.xlu0 %756
    %s758 = sadd.s32 %s73, 7
    %p759 = scmp.eq.s32.totalorder %s758, 7
    // Predicated region
    $region62: #{tpu_custom_call.1} parent=1 // pred_check
      %p760 = pneg %p759
    $region63: #{tpu_custom_call.1} parent=1 // pred_check_branch
      %762 = sbr.rel (%p760) target = $region65
    $region64: #{tpu_custom_call.1} parent=1 // pred_region
      %vm763 = vcmask 0
      %764 = vst.msk [vmem:[#allocation9] sm:$0x1] %vm763, %v757
    $region65: #{tpu_custom_call.1} parent=1 // pred_fallthru
      _
    %765 = vst [vmem:[#allocation2] sm:$0x1] %v752
    %vm766 = vcmask 0
    %767 = vst.msk [vmem:[#allocation3] sm:$0x1] %vm766, %v757
    // Predicated region
    $region66: #{tpu_custom_call.1} parent=1 // pred_check
      _
    $region67: #{tpu_custom_call.1} parent=1 // pred_check_branch
      %769 = sbr.rel (0) target = $region69
    $region68: #{tpu_custom_call.1} parent=1 // pred_region
      %s771 = ssub.s32 128, 128
      %772 = vsyncadd [#allocation7], %s771
      %s774 = sshll.u32 [#allocation8], 4
      %s775 = int_to_ptr.vmem [resolvable:$true] %s774
      %777 = dma.vmem_to_hbm [thread:$0]  %s775, 128, %s6, [#allocation7]
    $region69: #{tpu_custom_call.1} parent=1 // pred_fallthru
      _
    // Predicated region
    $region70: #{tpu_custom_call.1} parent=1 // pred_check
      _
    $region71: #{tpu_custom_call.1} parent=1 // pred_check_branch
      %779 = sbr.rel (0) target = $region73
    $region72: #{tpu_custom_call.1} parent=1 // pred_region
      %s781 = ssub.s32 16, 16
      %782 = vsyncadd [#allocation10], %s781
      %s784 = sshll.u32 [#allocation9], 4
      %s785 = int_to_ptr.vmem [resolvable:$true] %s784
      %787 = dma.vmem_to_hbm [thread:$0]  %s785, 16, %s7, [#allocation10]
    $region73: #{tpu_custom_call.1} parent=1 // pred_fallthru
      _
    // Predicated region
    $region74: #{tpu_custom_call.1} parent=1 // pred_check
      _
    $region75: #{tpu_custom_call.1} parent=1 // pred_check_branch
      %789 = sbr.rel (0) target = $region77
    $region76: #{tpu_custom_call.1} parent=1 // pred_region
      %790 = dma.done [#allocation7], 128
    $region77: #{tpu_custom_call.1} parent=1 // pred_fallthru
      _
    // Predicated region
    $region78: #{tpu_custom_call.1} parent=1 // pred_check
      _
    $region79: #{tpu_custom_call.1} parent=1 // pred_check_branch
      %792 = sbr.rel (0) target = $region81
    $region80: #{tpu_custom_call.1} parent=1 // pred_region
      %793 = dma.done [#allocation10], 16
    $region81: #{tpu_custom_call.1} parent=1 // pred_fallthru
      _
    %794 = vsyncpa [#allocation6], 1
    %795 = vsyncpa [#allocation7], 1
    %796 = vsyncpa [#allocation10], 1

</llo_original>
